<compile_context>
chip_gen: v7x
topology: tpu7x:2x2x1
jax: 0.10.0
libtpu: 0.0.40
codegen_flags: <defaults>
</compile_context>

<pallas_src>
import functools

import jax
import jax.numpy as jnp
from jax.experimental import pallas as pl
from jax.experimental.pallas import tpu as pltpu


def _round_up(n: int, m: int) -> int:
    return ((n + m - 1) // m) * m


def _rnn_seq_kernel(h0_ref, x_ref, wih_ref, bih_ref, who_ref, bho_ref,
                    out_ref, hfin_ref, h_scratch, xh_scratch,
                    *, i_pad: int, out_valid: int):
    """One grid step == one RNN time step. Hidden state carried in VMEM scratch."""
    t = pl.program_id(0)

    # Load the initial hidden state once; it stays in VMEM for the whole sequence.
    @pl.when(t == 0)
    def _():
        h_scratch[...] = h0_ref[...].astype(jnp.float32)

    # Build the fused [x_t, h_{t-1}] operand (bf16 for the MXU).
    xh_scratch[:, :i_pad] = x_ref[0]
    xh_scratch[:, i_pad:] = h_scratch[...].astype(xh_scratch.dtype)

    # hidden = tanh(i2h(x) + h2h(h))  -- single fused GEMM, f32 accumulation.
    pre = (jnp.dot(xh_scratch[...], wih_ref[...],
                   preferred_element_type=jnp.float32) + bih_ref[...])
    h_new = jnp.tanh(pre)
    h_scratch[...] = h_new

    # logits = h2o(hidden)
    logits = (jnp.dot(h_new.astype(who_ref.dtype), who_ref[...],
                      preferred_element_type=jnp.float32) + bho_ref[...])

    # Mask lane padding so it does not perturb the softmax normalizer.
    lane = jax.lax.broadcasted_iota(jnp.int32, logits.shape, 1)
    logits = jnp.where(lane < out_valid, logits, -jnp.inf)

    # Numerically stable log-softmax along the feature (lane) axis.
    m = jnp.max(logits, axis=-1, keepdims=True)
    shifted = logits - m
    lse = jnp.log(jnp.sum(jnp.exp(shifted), axis=-1, keepdims=True))
    out_ref[0] = (shifted - lse).astype(out_ref.dtype)

    # Emit the final hidden state once, at the last step (resident output block).
    @pl.when(t == pl.num_programs(0) - 1)
    def _():
        hfin_ref[...] = h_new.astype(hfin_ref.dtype)


def init_params(key, input_size, hidden_size, output_size,
                param_dtype=jnp.bfloat16):
    """nn.Linear-style init: U(-1/sqrt(fan_in), 1/sqrt(fan_in)).

    Weights are stored pre-transposed as (fan_in, fan_out) and cast to
    `param_dtype` (bf16 is the MXU-native input format); biases stay float32.
    """
    ks = jax.random.split(key, 6)

    def linear(kw, kb, fan_in, fan_out):
        bound = 1.0 / jnp.sqrt(fan_in)
        w = jax.random.uniform(kw, (fan_in, fan_out), jnp.float32, -bound, bound)
        b = jax.random.uniform(kb, (fan_out,), jnp.float32, -bound, bound)
        return w.astype(param_dtype), b

    wi, bi = linear(ks[0], ks[1], input_size, hidden_size)
    wh, bh = linear(ks[2], ks[3], hidden_size, hidden_size)
    wo, bo = linear(ks[4], ks[5], hidden_size, output_size)
    return (wi, bi, wh, bh, wo, bo)


def pack_params(params):
    """Fuse [Wi; Wh] along K, pre-sum bi+bh, zero-pad everything to (8,128) tiles."""
    wi, bi, wh, bh, wo, bo = params
    I, H = wi.shape
    O = wo.shape[1]
    Ip, Hp, Op = _round_up(I, 128), _round_up(H, 128), _round_up(O, 128)

    w_dtype = wi.dtype
    w_ih = jnp.zeros((Ip + Hp, Hp), w_dtype)
    w_ih = w_ih.at[:I, :H].set(wi).at[Ip:Ip + H, :H].set(wh)
    b_ih = jnp.zeros((1, Hp), jnp.float32).at[0, :H].set(bi + bh)

    w_ho = jnp.zeros((Hp, Op), w_dtype).at[:H, :O].set(wo)
    b_ho = jnp.zeros((1, Op), jnp.float32).at[0, :O].set(bo)
    return (w_ih, b_ih, w_ho, b_ho), (int(I), int(H), int(O))


@functools.partial(jax.jit, static_argnums=3)
def rnn_sequence_forward(x_seq, h0, packed, dims):
    """Runs the RNN over a whole sequence in one fused Pallas kernel.

    x_seq: (T, B, I) float32, h0: (B, H) float32.
    Returns (log_probs: (T, B, O) float32, h_final: (B, H) float32).
    """
    w_ih, b_ih, w_ho, b_ho = packed
    I, H, O = dims
    T, B, _ = x_seq.shape
    Hp = w_ih.shape[1]
    Ip = w_ih.shape[0] - Hp
    Op = w_ho.shape[1]
    Bp = _round_up(max(B, 8), 8)

    # Zero padding is exact: padded hidden lanes see zero weight columns and
    # zero bias, so they stay exactly 0 through the recurrence.
    x_pad = jnp.zeros((T, Bp, Ip), jnp.bfloat16).at[:, :B, :I].set(
        x_seq.astype(jnp.bfloat16))
    h0_pad = jnp.zeros((Bp, Hp), jnp.float32).at[:B, :H].set(h0)

    kernel = functools.partial(_rnn_seq_kernel, i_pad=Ip, out_valid=O)

    flops = T * (2 * Bp * (Ip + Hp) * Hp + 2 * Bp * Hp * Op)
    transcendentals = T * Bp * (Hp + Op)
    bytes_accessed = (x_pad.size * 2                 # x in (bf16)
                      + T * Bp * Op * 4              # log-probs out (f32)
                      + Bp * Hp * 4 * 2              # h0 in + h_final out
                      + (w_ih.size + w_ho.size) * 2  # bf16 weights (loaded once)
                      + (b_ih.size + b_ho.size) * 4)

    out_pad, h_fin_pad = pl.pallas_call(
        kernel,
        out_shape=(
            jax.ShapeDtypeStruct((T, Bp, Op), jnp.float32),
            jax.ShapeDtypeStruct((Bp, Hp), jnp.float32),
        ),
        grid_spec=pltpu.PrefetchScalarGridSpec(
            num_scalar_prefetch=0,
            grid=(T,),
            in_specs=[
                pl.BlockSpec((Bp, Hp), lambda t: (0, 0)),        # h0 (resident)
                pl.BlockSpec((1, Bp, Ip), lambda t: (t, 0, 0)),  # x_t (streamed)
                pl.BlockSpec((Ip + Hp, Hp), lambda t: (0, 0)),   # [Wi; Wh] (resident)
                pl.BlockSpec((1, Hp), lambda t: (0, 0)),         # bi + bh
                pl.BlockSpec((Hp, Op), lambda t: (0, 0)),        # Wo (resident)
                pl.BlockSpec((1, Op), lambda t: (0, 0)),         # bo
            ],
            out_specs=(
                pl.BlockSpec((1, Bp, Op), lambda t: (t, 0, 0)),  # lane-dense log-probs
                pl.BlockSpec((Bp, Hp), lambda t: (0, 0)),        # final hidden
            ),
            scratch_shapes=[
                pltpu.VMEM((Bp, Hp), jnp.float32),        # hidden-state carry
                pltpu.VMEM((Bp, Ip + Hp), jnp.bfloat16),  # fused [x, h] MXU operand
            ],
        ),
        compiler_params=pltpu.CompilerParams(
            # Time axis carries state through scratch -> must stay sequential.
            dimension_semantics=("arbitrary",),
            # NOTE: at large H, keep bf16 weights and set vmem_limit_bytes
            # explicitly so the weights-resident strategy also fits v7x (64 MiB).
        ),
        cost_estimate=pl.CostEstimate(
            flops=flops, transcendentals=transcendentals,
            bytes_accessed=bytes_accessed),
    )(h0_pad, x_pad, w_ih, b_ih, w_ho, b_ho)

    return out_pad[:, :B, :O], h_fin_pad[:B, :H]


def rnn_forward(x, h, packed, dims):
    """Exact RNN.forward(input, hidden) semantics (single step, T=1)."""
    out_seq, h_new = rnn_sequence_forward(x[None], h, packed, dims)
    return out_seq[0], h_new


# ---------------------------------------------------------------------------
# Pure-JAX reference (same bf16-stored weights, same cast points as the kernel)
# ---------------------------------------------------------------------------
def reference_step(x, h, params):
    wi, bi, wh, bh, wo, bo = params
    f32 = jnp.float32
    xb = x.astype(jnp.bfloat16).astype(f32)   # kernel feeds x to the MXU in bf16
    hb = h.astype(jnp.bfloat16).astype(f32)   # kernel feeds h to the MXU in bf16
    h_new = jnp.tanh(xb @ wi.astype(f32) + hb @ wh.astype(f32) + (bi + bh))
    logits = h_new.astype(jnp.bfloat16).astype(f32) @ wo.astype(f32) + bo
    m = jnp.max(logits, axis=-1, keepdims=True)
    shifted = logits - m
    log_probs = shifted - jnp.log(jnp.sum(jnp.exp(shifted), axis=-1, keepdims=True))
    return log_probs, h_new


def reference_sequence(x_seq, h0, params):
    outs, h = [], h0
    for t in range(x_seq.shape[0]):
        o, h = reference_step(x_seq[t], h, params)
        outs.append(o)
    return jnp.stack(outs), h


if __name__ == "__main__":
    input_size, hidden_size, output_size = 8, 32, 16
    batch, seq_len = 2, 8

    key = jax.random.PRNGKey(0)
    k_x, k_p = jax.random.split(key)

    params = init_params(k_p, input_size, hidden_size, output_size)
    packed, dims = pack_params(params)

    x_seq = jax.random.normal(k_x, (seq_len, batch, input_size), jnp.float32)
    h0 = jnp.zeros((batch, hidden_size), jnp.float32)  # init_hidden() broadcast to batch

    # Full-sequence fused kernel.
    out_seq, h_fin = rnn_sequence_forward(x_seq, h0, packed, dims)
    out_seq = jax.block_until_ready(out_seq)
    h_fin = jax.block_until_ready(h_fin)

    ref_seq, ref_h = reference_sequence(x_seq, h0, params)
    assert jnp.allclose(out_seq, ref_seq, atol=1e-4, rtol=1e-4), \
        float(jnp.max(jnp.abs(out_seq - ref_seq)))
    assert jnp.allclose(h_fin, ref_h, atol=1e-4, rtol=1e-4), \
        float(jnp.max(jnp.abs(h_fin - ref_h)))

    # Single-step call with the module's forward(input, hidden) signature.
    out1, h1 = rnn_forward(x_seq[0], h0, packed, dims)
    out1 = jax.block_until_ready(out1)
    ref1, ref_h1 = reference_step(x_seq[0], h0, params)
    assert jnp.allclose(out1, ref1, atol=1e-4, rtol=1e-4)
    assert jnp.allclose(h1, ref_h1, atol=1e-4, rtol=1e-4)

    print("KERNEL_OK")
</pallas_src>

<mosaic_0001>
module attributes {stable_mosaic.version = 11 : i64} {
  func.func @_rnn_seq_kernel(%arg0: i32, %arg1: memref<8x128xf32, #tpu.memory_space<vmem>>, %arg2: memref<1x8x128xbf16, #tpu.memory_space<vmem>>, %arg3: memref<256x128xbf16, #tpu.memory_space<vmem>>, %arg4: memref<1x128xf32, #tpu.memory_space<vmem>>, %arg5: memref<128x128xbf16, #tpu.memory_space<vmem>>, %arg6: memref<1x128xf32, #tpu.memory_space<vmem>>, %arg7: memref<1x8x128xf32, #tpu.memory_space<vmem>>, %arg8: memref<8x128xf32, #tpu.memory_space<vmem>>, %arg9: memref<8x128xf32, #tpu.memory_space<vmem>>, %arg10: memref<8x256xbf16, #tpu.memory_space<vmem>>) attributes {dimension_semantics = [#tpu.dimension_semantics<arbitrary>], iteration_bounds = array<i64: 8>, scalar_prefetch = 0 : i64, scratch_operands = 2 : i64, tpu.core_type = #tpu.core_type<tc>, window_params = [{pipeline_mode = #tpu.pipeline_mode<synchronous>, transform_indices = @transform_0, window_bounds = array<i64: 8, 128>}, {transform_indices = @transform_1, window_bounds = array<i64: 1, 8, 128>}, {pipeline_mode = #tpu.pipeline_mode<synchronous>, transform_indices = @transform_2, window_bounds = array<i64: 256, 128>}, {pipeline_mode = #tpu.pipeline_mode<synchronous>, transform_indices = @transform_3, window_bounds = array<i64: 1, 128>}, {pipeline_mode = #tpu.pipeline_mode<synchronous>, transform_indices = @transform_4, window_bounds = array<i64: 128, 128>}, {pipeline_mode = #tpu.pipeline_mode<synchronous>, transform_indices = @transform_5, window_bounds = array<i64: 1, 128>}, {transform_indices = @transform_6, window_bounds = array<i64: 1, 8, 128>}, {pipeline_mode = #tpu.pipeline_mode<synchronous>, transform_indices = @transform_7, window_bounds = array<i64: 8, 128>}]} {
    %c0_i32 = arith.constant 0 : i32
    %0 = arith.cmpi eq, %arg0, %c0_i32 : i32
    %1 = arith.extui %0 : i1 to i32
    %c0_i32_0 = arith.constant 0 : i32
    %2 = arith.cmpi ne, %1, %c0_i32_0 : i32
    scf.if %2 {
      %c0_28 = arith.constant 0 : index
      %c0_29 = arith.constant 0 : index
      %44 = vector.load %arg1[%c0_28, %c0_29] : memref<8x128xf32, #tpu.memory_space<vmem>>, vector<8x128xf32>
      %c0_30 = arith.constant 0 : index
      %c0_31 = arith.constant 0 : index
      %45 = vector.load %arg9[%c0_30, %c0_31] : memref<8x128xf32, #tpu.memory_space<vmem>>, vector<8x128xf32>
      tpu.vector_store %arg9[%c0_30, %c0_31], %44 {strides = array<i32>} : memref<8x128xf32, #tpu.memory_space<vmem>>, vector<8x128xf32>,
    } else {
    }
    %c0 = arith.constant 0 : index
    %c0_1 = arith.constant 0 : index
    %c0_2 = arith.constant 0 : index
    %3 = vector.load %arg2[%c0, %c0_1, %c0_2] : memref<1x8x128xbf16, #tpu.memory_space<vmem>>, vector<1x8x128xbf16>
    %4 = vector.shape_cast %3 : vector<1x8x128xbf16> to vector<8x128xbf16>
    %c0_3 = arith.constant 0 : index
    %c0_4 = arith.constant 0 : index
    %5 = vector.load %arg10[%c0_3, %c0_4] : memref<8x256xbf16, #tpu.memory_space<vmem>>, vector<8x128xbf16>
    tpu.vector_store %arg10[%c0_3, %c0_4], %4 {strides = array<i32>} : memref<8x256xbf16, #tpu.memory_space<vmem>>, vector<8x128xbf16>,
    %c0_5 = arith.constant 0 : index
    %c0_6 = arith.constant 0 : index
    %6 = vector.load %arg9[%c0_5, %c0_6] : memref<8x128xf32, #tpu.memory_space<vmem>>, vector<8x128xf32>
    %7 = arith.truncf %6 : vector<8x128xf32> to vector<8x128xbf16>
    %c0_7 = arith.constant 0 : index
    %c128 = arith.constant 128 : index
    %8 = vector.load %arg10[%c0_7, %c128] : memref<8x256xbf16, #tpu.memory_space<vmem>>, vector<8x128xbf16>
    tpu.vector_store %arg10[%c0_7, %c128], %7 {strides = array<i32>} : memref<8x256xbf16, #tpu.memory_space<vmem>>, vector<8x128xbf16>,
    %c0_8 = arith.constant 0 : index
    %c0_9 = arith.constant 0 : index
    %9 = vector.load %arg10[%c0_8, %c0_9] : memref<8x256xbf16, #tpu.memory_space<vmem>>, vector<8x256xbf16>
    %c0_10 = arith.constant 0 : index
    %c0_11 = arith.constant 0 : index
    %10 = vector.load %arg3[%c0_10, %c0_11] : memref<256x128xbf16, #tpu.memory_space<vmem>>, vector<256x128xbf16>
    %cst = arith.constant dense<0.000000e+00> : vector<8x128xf32>
    %11 = tpu.matmul %9, %10, %cst {dimension_numbers = #tpu.dot_dimension_numbers<[1], [0], [0], [1], [0, 0, 1, 1], [], []>} : vector<8x256xbf16>, vector<256x128xbf16>, vector<8x128xf32> -> vector<8x128xf32>
    %c0_12 = arith.constant 0 : index
    %c0_13 = arith.constant 0 : index
    %12 = vector.load %arg4[%c0_12, %c0_13] : memref<1x128xf32, #tpu.memory_space<vmem>>, vector<1x128xf32>
    %13 = vector.broadcast %12 : vector<1x128xf32> to vector<8x128xf32>
    %14 = arith.addf %11, %13 : vector<8x128xf32>
    %15 = math.tanh %14 : vector<8x128xf32>
    %c0_14 = arith.constant 0 : index
    %c0_15 = arith.constant 0 : index
    %16 = vector.load %arg9[%c0_14, %c0_15] : memref<8x128xf32, #tpu.memory_space<vmem>>, vector<8x128xf32>
    tpu.vector_store %arg9[%c0_14, %c0_15], %15 {strides = array<i32>} : memref<8x128xf32, #tpu.memory_space<vmem>>, vector<8x128xf32>,
    %17 = arith.truncf %15 : vector<8x128xf32> to vector<8x128xbf16>
    %c0_16 = arith.constant 0 : index
    %c0_17 = arith.constant 0 : index
    %18 = vector.load %arg5[%c0_16, %c0_17] : memref<128x128xbf16, #tpu.memory_space<vmem>>, vector<128x128xbf16>
    %cst_18 = arith.constant dense<0.000000e+00> : vector<8x128xf32>
    %19 = tpu.matmul %17, %18, %cst_18 {dimension_numbers = #tpu.dot_dimension_numbers<[1], [0], [0], [1], [0, 0, 1, 1], [], []>} : vector<8x128xbf16>, vector<128x128xbf16>, vector<8x128xf32> -> vector<8x128xf32>
    %c0_19 = arith.constant 0 : index
    %c0_20 = arith.constant 0 : index
    %20 = vector.load %arg6[%c0_19, %c0_20] : memref<1x128xf32, #tpu.memory_space<vmem>>, vector<1x128xf32>
    %21 = vector.broadcast %20 : vector<1x128xf32> to vector<8x128xf32>
    %22 = arith.addf %19, %21 : vector<8x128xf32>
    %23 = tpu.iota {dimensions = array<i32: 1>} : vector<8x128xi32>
    %c16_i32 = arith.constant 16 : i32
    %24 = vector.broadcast %c16_i32 : i32 to vector<8x128xi32>
    %25 = arith.cmpi slt, %23, %24 : vector<8x128xi32>
    %cst_21 = arith.constant 0xFF800000 : f32
    %26 = vector.broadcast %cst_21 : f32 to vector<8x128xf32>
    %27 = arith.select %25, %22, %26 : vector<8x128xi1>, vector<8x128xf32>
    %cst_22 = arith.constant dense<0xFF800000> : vector<8xf32>
    %28 = vector.multi_reduction <maximumf>, %27, %cst_22 [1] : vector<8x128xf32> to vector<8xf32>
    %29 = vector.shape_cast %28 : vector<8xf32> to vector<8x1xf32>
    %30 = vector.broadcast %29 : vector<8x1xf32> to vector<8x128xf32>
    %31 = arith.subf %27, %30 : vector<8x128xf32>
    %32 = math.exp %31 : vector<8x128xf32>
    %cst_23 = arith.constant dense<0.000000e+00> : vector<8xf32>
    %33 = vector.multi_reduction <add>, %32, %cst_23 [1] : vector<8x128xf32> to vector<8xf32>
    %34 = vector.shape_cast %33 : vector<8xf32> to vector<8x1xf32>
    %35 = math.log %34 : vector<8x1xf32>
    %36 = vector.broadcast %35 : vector<8x1xf32> to vector<8x128xf32>
    %37 = arith.subf %31, %36 : vector<8x128xf32>
    %c0_24 = arith.constant 0 : index
    %c0_25 = arith.constant 0 : index
    %c0_26 = arith.constant 0 : index
    %38 = vector.load %arg7[%c0_24, %c0_25, %c0_26] : memref<1x8x128xf32, #tpu.memory_space<vmem>>, vector<1x8x128xf32>
    %39 = vector.shape_cast %38 : vector<1x8x128xf32> to vector<8x128xf32>
    %40 = vector.shape_cast %37 : vector<8x128xf32> to vector<1x8x128xf32>
    tpu.vector_store %arg7[%c0_24, %c0_25, %c0_26], %40 {strides = array<i32>} : memref<1x8x128xf32, #tpu.memory_space<vmem>>, vector<1x8x128xf32>,
    %c7_i32 = arith.constant 7 : i32
    %41 = arith.cmpi eq, %arg0, %c7_i32 : i32
    %42 = arith.extui %41 : i1 to i32
    %c0_i32_27 = arith.constant 0 : i32
    %43 = arith.cmpi ne, %42, %c0_i32_27 : i32
    scf.if %43 {
      %c0_28 = arith.constant 0 : index
      %c0_29 = arith.constant 0 : index
      %44 = vector.load %arg8[%c0_28, %c0_29] : memref<8x128xf32, #tpu.memory_space<vmem>>, vector<8x128xf32>
      tpu.vector_store %arg8[%c0_28, %c0_29], %15 {strides = array<i32>} : memref<8x128xf32, #tpu.memory_space<vmem>>, vector<8x128xf32>,
    } else {
    }
    return
  }
  func.func @transform_0(%arg0: i32) -> (i32, i32) {
    %c0_i32 = arith.constant 0 : i32
    %c0_i32_0 = arith.constant 0 : i32
    %c0_i32_1 = arith.constant 0 : i32
    return %c0_i32, %c0_i32_0 : i32, i32
  }
  func.func @transform_1(%arg0: i32) -> (i32, i32, i32) {
    %c0_i32 = arith.constant 0 : i32
    %c0_i32_0 = arith.constant 0 : i32
    %c0_i32_1 = arith.constant 0 : i32
    return %arg0, %c0_i32, %c0_i32_0 : i32, i32, i32
  }
  func.func @transform_2(%arg0: i32) -> (i32, i32) {
    %c0_i32 = arith.constant 0 : i32
    %c0_i32_0 = arith.constant 0 : i32
    %c0_i32_1 = arith.constant 0 : i32
    return %c0_i32, %c0_i32_0 : i32, i32
  }
  func.func @transform_3(%arg0: i32) -> (i32, i32) {
    %c0_i32 = arith.constant 0 : i32
    %c0_i32_0 = arith.constant 0 : i32
    %c0_i32_1 = arith.constant 0 : i32
    return %c0_i32, %c0_i32_0 : i32, i32
  }
  func.func @transform_4(%arg0: i32) -> (i32, i32) {
    %c0_i32 = arith.constant 0 : i32
    %c0_i32_0 = arith.constant 0 : i32
    %c0_i32_1 = arith.constant 0 : i32
    return %c0_i32, %c0_i32_0 : i32, i32
  }
  func.func @transform_5(%arg0: i32) -> (i32, i32) {
    %c0_i32 = arith.constant 0 : i32
    %c0_i32_0 = arith.constant 0 : i32
    %c0_i32_1 = arith.constant 0 : i32
    return %c0_i32, %c0_i32_0 : i32, i32
  }
  func.func @transform_6(%arg0: i32) -> (i32, i32, i32) {
    %c0_i32 = arith.constant 0 : i32
    %c0_i32_0 = arith.constant 0 : i32
    %c0_i32_1 = arith.constant 0 : i32
    return %arg0, %c0_i32, %c0_i32_0 : i32, i32, i32
  }
  func.func @transform_7(%arg0: i32) -> (i32, i32) {
    %c0_i32 = arith.constant 0 : i32
    %c0_i32_0 = arith.constant 0 : i32
    %c0_i32_1 = arith.constant 0 : i32
    return %c0_i32, %c0_i32_0 : i32, i32
  }
}

</mosaic_0001>

<llo_original>
// kernel: rnn_sequence_forward.1
$region0: #{rnn_sequence_forward.1}
  #allocation0 [shape = 'u32[]', space=smem, size = 0x4, offset = 0x4, fixed_abs, tag = 'smem constant byte address 0x4 - core index']
  #allocation1 [shape = 'u32[144,128]{1,0:T(1,128)}', space=vmem, size = 0x12000, scoped, tag = 'internal scratch']
  #allocation2 [shape = 'f32[8,128]{1,0:T(8,128)}', space=vmem, size = 0x1000, scoped, tag = 'scratch operand']
  #allocation3 [shape = 'bf16[8,256]{1,0:T(8,128)(2,1)}', space=vmem, size = 0x1000, scoped, tag = 'scratch operand']
  %s0 = inlined_call_operand.vmem [shape: f32[8,128], index: 0, kind: input, shape index: {}]
  %s1 = inlined_call_operand.vmem [shape: bf16[8,8,128], index: 1, kind: input, shape index: {}]
  %s2 = inlined_call_operand.hbm [shape: bf16[256,128], index: 2, kind: input, shape index: {}]
  %s3 = inlined_call_operand.vmem [shape: f32[1,128], index: 3, kind: input, shape index: {}]
  %s4 = inlined_call_operand.vmem [shape: bf16[128,128], index: 4, kind: input, shape index: {}]
  %s5 = inlined_call_operand.vmem [shape: f32[1,128], index: 5, kind: input, shape index: {}]
  %s6 = inlined_call_operand.vmem [shape: f32[8,8,128], index: 6, kind: output, shape index: {0}]
  %s7 = inlined_call_operand.vmem [shape: f32[8,128], index: 7, kind: output, shape index: {1}]
  %8 = xla_tuple %s6, %s7
  %s9 = sld [smem:[#allocation0]]
  $region77: #{rnn_sequence_forward.1} parent=0
    _
  %s11 = ssub.s32 1, %s9
  %s12 = scalar_select 0, %s11, %s9
  $region1: #{rnn_sequence_forward.1} parent=0
    #allocation4 [shape = 'u8[65536]{0}', space=vmem, size = 0x10000, scoped, tag = 'input window, operand 2, single buffered']
    #allocation5 [shape = 's32[2]{0}', space=sflag, size = 0x8, scoped, tag = 'scoped memory for rnn_sequence_forward.1']
    %13 = vsyncpa [#allocation5], 0
    loop: start=0, step=1, limit=10
    $region2: #{rnn_sequence_forward.1} parent=1 // loop_pre_header
      _
    $region3: #{rnn_sequence_forward.1} parent=1 // loop_header
      %s15 = sphi 0, %s19
      %p16 = scmp.ge.s32.totalorder %s15, 10
      %s23 = sphi 0, %s23
      %s25 = sphi 0, %s23
      %s26 = sphi 0, %s25
      %s40 = sphi 0, %s26
      %s46 = sphi 0, %s48
      %s49 = sphi 0, %s46
      %s50 = sphi 0, %s49
      %s66 = sphi 0, %s50
      %s70 = sphi 0, %s70
      %s72 = sphi 0, %s70
      %s73 = sphi 0, %s72
      %s87 = sphi 0, %s73
      %s91 = sphi 0, %s91
      %s93 = sphi 0, %s91
      %s94 = sphi 0, %s93
      %s108 = sphi 0, %s94
      %s112 = sphi 0, %s112
      %s114 = sphi 0, %s112
      %s115 = sphi 0, %s114
      %s129 = sphi 0, %s115
      %s133 = sphi 0, %s133
      %s135 = sphi 0, %s133
      %s136 = sphi 0, %s135
      %s150 = sphi 0, %s136
      %s156 = sphi 0, %s158
      %s159 = sphi 0, %s156
      %s160 = sphi 0, %s159
      %s176 = sphi 0, %s160
      %s180 = sphi 0, %s180
      %s182 = sphi 0, %s180
      %s183 = sphi 0, %s182
      %s197 = sphi 0, %s183
    $region4: #{rnn_sequence_forward.1} parent=1 // loop_header_branch
      %18 = sbr.rel (%p16) target = $region8
    $region5: #{rnn_sequence_forward.1} parent=1 // loop_body
      %s20 = ssub.s32 %s15, 1
      %s21 = ssub.s32 %s15, 2
      %s22 = sadd.s32 %s15, 1
      %s24 = sadd.s32 %s23, 1
      %p27 = scmp.eq.s32.totalorder %s15, 7
      %p28 = scmp.ne.s32.totalorder %s23, %s25
      %p29 = scmp.eq.s32.totalorder %s15, 0
      %p30 = por %p28, %p29
      %p31 = scmp.ne.s32.totalorder %s23, %s25
      %p32 = scmp.eq.s32.totalorder %s20, 7
      %p33 = por %p31, %p32
      %p34 = scmp.ne.s32.totalorder %s25, %s26
      %p35 = scmp.eq.s32.totalorder %s20, 0
      %p36 = por %p34, %p35
      %p37 = scmp.ne.s32.totalorder %s25, %s26
      %p38 = scmp.eq.s32.totalorder %s21, 7
      %p39 = por %p37, %p38
      %p41 = scmp.ne.s32.totalorder %s26, %s40
      %p42 = scmp.eq.s32.totalorder %s21, 0
      %p43 = por %p41, %p42
      %s44 = ssub.s32 %s15, %s22
      %p45 = scmp.eq.s32.totalorder %s44, 0
      %s47 = sadd.s32 %s46, 1
      %s48 = scalar_select %p45, %s46, %s47
      %p51 = pneg %p45
      %p52 = scmp.eq.s32.totalorder %s15, 7
      %p53 = por %p51, %p52
      %p54 = scmp.ne.s32.totalorder %s46, %s49
      %p55 = scmp.eq.s32.totalorder %s15, 0
      %p56 = por %p54, %p55
      %p57 = scmp.ne.s32.totalorder %s46, %s49
      %p58 = scmp.eq.s32.totalorder %s20, 7
      %p59 = por %p57, %p58
      %p60 = scmp.ne.s32.totalorder %s49, %s50
      %p61 = scmp.eq.s32.totalorder %s20, 0
      %p62 = por %p60, %p61
      %p63 = scmp.ne.s32.totalorder %s49, %s50
      %p64 = scmp.eq.s32.totalorder %s21, 7
      %p65 = por %p63, %p64
      %p67 = scmp.ne.s32.totalorder %s50, %s66
      %p68 = scmp.eq.s32.totalorder %s21, 0
      %p69 = por %p67, %p68
      %s71 = sadd.s32 %s70, 1
      %p74 = scmp.eq.s32.totalorder %s15, 7
      %p75 = scmp.ne.s32.totalorder %s70, %s72
      %p76 = scmp.eq.s32.totalorder %s15, 0
      %p77 = por %p75, %p76
      %p78 = scmp.ne.s32.totalorder %s70, %s72
      %p79 = scmp.eq.s32.totalorder %s20, 7
      %p80 = por %p78, %p79
      %p81 = scmp.ne.s32.totalorder %s72, %s73
      %p82 = scmp.eq.s32.totalorder %s20, 0
      %p83 = por %p81, %p82
      %p84 = scmp.ne.s32.totalorder %s72, %s73
      %p85 = scmp.eq.s32.totalorder %s21, 7
      %p86 = por %p84, %p85
      %p88 = scmp.ne.s32.totalorder %s73, %s87
      %p89 = scmp.eq.s32.totalorder %s21, 0
      %p90 = por %p88, %p89
      %s92 = sadd.s32 %s91, 1
      %p95 = scmp.eq.s32.totalorder %s15, 7
      %p96 = scmp.ne.s32.totalorder %s91, %s93
      %p97 = scmp.eq.s32.totalorder %s15, 0
      %p98 = por %p96, %p97
      %p99 = scmp.ne.s32.totalorder %s91, %s93
      %p100 = scmp.eq.s32.totalorder %s20, 7
      %p101 = por %p99, %p100
      %p102 = scmp.ne.s32.totalorder %s93, %s94
      %p103 = scmp.eq.s32.totalorder %s20, 0
      %p104 = por %p102, %p103
      %p105 = scmp.ne.s32.totalorder %s93, %s94
      %p106 = scmp.eq.s32.totalorder %s21, 7
      %p107 = por %p105, %p106
      %p109 = scmp.ne.s32.totalorder %s94, %s108
      %p110 = scmp.eq.s32.totalorder %s21, 0
      %p111 = por %p109, %p110
      %s113 = sadd.s32 %s112, 1
      %p116 = scmp.eq.s32.totalorder %s15, 7
      %p117 = scmp.ne.s32.totalorder %s112, %s114
      %p118 = scmp.eq.s32.totalorder %s15, 0
      %p119 = por %p117, %p118
      %p120 = scmp.ne.s32.totalorder %s112, %s114
      %p121 = scmp.eq.s32.totalorder %s20, 7
      %p122 = por %p120, %p121
      %p123 = scmp.ne.s32.totalorder %s114, %s115
      %p124 = scmp.eq.s32.totalorder %s20, 0
      %p125 = por %p123, %p124
      %p126 = scmp.ne.s32.totalorder %s114, %s115
      %p127 = scmp.eq.s32.totalorder %s21, 7
      %p128 = por %p126, %p127
      %p130 = scmp.ne.s32.totalorder %s115, %s129
      %p131 = scmp.eq.s32.totalorder %s21, 0
      %p132 = por %p130, %p131
      %s134 = sadd.s32 %s133, 1
      %p137 = scmp.eq.s32.totalorder %s15, 7
      %p138 = scmp.ne.s32.totalorder %s133, %s135
      %p139 = scmp.eq.s32.totalorder %s15, 0
      %p140 = por %p138, %p139
      %p141 = scmp.ne.s32.totalorder %s133, %s135
      %p142 = scmp.eq.s32.totalorder %s20, 7
      %p143 = por %p141, %p142
      %p144 = scmp.ne.s32.totalorder %s135, %s136
      %p145 = scmp.eq.s32.totalorder %s20, 0
      %p146 = por %p144, %p145
      %p147 = scmp.ne.s32.totalorder %s135, %s136
      %p148 = scmp.eq.s32.totalorder %s21, 7
      %p149 = por %p147, %p148
      %p151 = scmp.ne.s32.totalorder %s136, %s150
      %p152 = scmp.eq.s32.totalorder %s21, 0
      %p153 = por %p151, %p152
      %s154 = ssub.s32 %s15, %s22
      %p155 = scmp.eq.s32.totalorder %s154, 0
      %s157 = sadd.s32 %s156, 1
      %s158 = scalar_select %p155, %s156, %s157
      %p161 = pneg %p155
      %p162 = scmp.eq.s32.totalorder %s15, 7
      %p163 = por %p161, %p162
      %p164 = scmp.ne.s32.totalorder %s156, %s159
      %p165 = scmp.eq.s32.totalorder %s15, 0
      %p166 = por %p164, %p165
      %p167 = scmp.ne.s32.totalorder %s156, %s159
      %p168 = scmp.eq.s32.totalorder %s20, 7
      %p169 = por %p167, %p168
      %p170 = scmp.ne.s32.totalorder %s159, %s160
      %p171 = scmp.eq.s32.totalorder %s20, 0
      %p172 = por %p170, %p171
      %p173 = scmp.ne.s32.totalorder %s159, %s160
      %p174 = scmp.eq.s32.totalorder %s21, 7
      %p175 = por %p173, %p174
      %p177 = scmp.ne.s32.totalorder %s160, %s176
      %p178 = scmp.eq.s32.totalorder %s21, 0
      %p179 = por %p177, %p178
      %s181 = sadd.s32 %s180, 1
      %p184 = scmp.eq.s32.totalorder %s15, 7
      %p185 = scmp.ne.s32.totalorder %s180, %s182
      %p186 = scmp.eq.s32.totalorder %s15, 0
      %p187 = por %p185, %p186
      %p188 = scmp.ne.s32.totalorder %s180, %s182
      %p189 = scmp.eq.s32.totalorder %s20, 7
      %p190 = por %p188, %p189
      %p191 = scmp.ne.s32.totalorder %s182, %s183
      %p192 = scmp.eq.s32.totalorder %s20, 0
      %p193 = por %p191, %p192
      %p194 = scmp.ne.s32.totalorder %s182, %s183
      %p195 = scmp.eq.s32.totalorder %s21, 7
      %p196 = por %p194, %p195
      %p198 = scmp.ne.s32.totalorder %s183, %s197
      %p199 = scmp.eq.s32.totalorder %s21, 0
      %p200 = por %p198, %p199
      %p201 = scmp.le.s32.totalorder 1, %s15
      %p202 = scmp.lt.s32.totalorder %s15, 9
      %p203 = pnand %p201, %p202
      %p204 = pneg %p203
      // Predicated region
      $region9: #{rnn_sequence_forward.1} parent=5 // pred_check
        _
      $region10: #{rnn_sequence_forward.1} parent=5 // pred_check_branch
        %206 = sbr.rel (%p203) target = $region12
      $region11: #{rnn_sequence_forward.1} parent=5 // pred_region
        %s207 = ssub.s32 %s15, 1
        // Predicated region
        $region13: #{rnn_sequence_forward.1} parent=11 // pred_check
          %p208 = pneg %p36
        $region14: #{rnn_sequence_forward.1} parent=11 // pred_check_branch
          %210 = sbr.rel (%p208) target = $region16
        $region15: #{rnn_sequence_forward.1} parent=11 // pred_region
          _
        $region16: #{rnn_sequence_forward.1} parent=11 // pred_fallthru
          _
        // Predicated region
        $region17: #{rnn_sequence_forward.1} parent=11 // pred_check
          %p211 = pneg %p83
        $region18: #{rnn_sequence_forward.1} parent=11 // pred_check_branch
          %213 = sbr.rel (%p211) target = $region20
        $region19: #{rnn_sequence_forward.1} parent=11 // pred_region
          %s215 = ssub.s32 2048, 2048
          %216 = vsyncadd [#allocation5], %s215
          %s217 = sshll.u32 [#allocation4], 4
          %s218 = int_to_ptr.vmem [resolvable:$true] %s217
          %223 = dma.hbm_to_vmem [thread:$0]  %s2, 2048, %s218, [#allocation5], 64, 64, 4
        $region20: #{rnn_sequence_forward.1} parent=11 // pred_fallthru
          _
        // Predicated region
        $region21: #{rnn_sequence_forward.1} parent=11 // pred_check
          %p224 = pneg %p104
        $region22: #{rnn_sequence_forward.1} parent=11 // pred_check_branch
          %226 = sbr.rel (%p224) target = $region24
        $region23: #{rnn_sequence_forward.1} parent=11 // pred_region
          _
        $region24: #{rnn_sequence_forward.1} parent=11 // pred_fallthru
          _
        // Predicated region
        $region25: #{rnn_sequence_forward.1} parent=11 // pred_check
          %p227 = pneg %p125
        $region26: #{rnn_sequence_forward.1} parent=11 // pred_check_branch
          %229 = sbr.rel (%p227) target = $region28
        $region27: #{rnn_sequence_forward.1} parent=11 // pred_region
          _
        $region28: #{rnn_sequence_forward.1} parent=11 // pred_fallthru
          _
        // Predicated region
        $region29: #{rnn_sequence_forward.1} parent=11 // pred_check
          %p230 = pneg %p146
        $region30: #{rnn_sequence_forward.1} parent=11 // pred_check_branch
          %232 = sbr.rel (%p230) target = $region32
        $region31: #{rnn_sequence_forward.1} parent=11 // pred_region
          _
        $region32: #{rnn_sequence_forward.1} parent=11 // pred_fallthru
          _
      $region12: #{rnn_sequence_forward.1} parent=5 // pred_fallthru
        _
      %p233 = scmp.lt.s32.totalorder %s15, 8
      // Predicated region
      $region33: #{rnn_sequence_forward.1} parent=5 // pred_check
        %p234 = pneg %p233
      $region34: #{rnn_sequence_forward.1} parent=5 // pred_check_branch
        %236 = sbr.rel (%p234) target = $region36
      $region35: #{rnn_sequence_forward.1} parent=5 // pred_region
        // Predicated region
        $region37: #{rnn_sequence_forward.1} parent=35 // pred_check
          %p237 = pneg %p56
        $region38: #{rnn_sequence_forward.1} parent=35 // pred_check_branch
          %239 = sbr.rel (%p237) target = $region40
        $region39: #{rnn_sequence_forward.1} parent=35 // pred_region
          %p240 = scmp.lt.s32.totalorder %s15, 7
          %s241 = scalar_select %p240, %s15, 7
          %s242 = smul.addr %s241, 4
          %s243 = scalar_lea.vmem %s1, %s242
        $region40: #{rnn_sequence_forward.1} parent=35 // pred_fallthru
          _
      $region36: #{rnn_sequence_forward.1} parent=5 // pred_fallthru
        _
      %p244 = scmp.le.s32.totalorder 1, %s15
      %p245 = scmp.lt.s32.totalorder %s15, 9
      %p246 = pnand %p244, %p245
      %p247 = pneg %p246
      // Predicated region
      $region41: #{rnn_sequence_forward.1} parent=5 // pred_check
        _
      $region42: #{rnn_sequence_forward.1} parent=5 // pred_check_branch
        %249 = sbr.rel (%p246) target = $region44
      $region43: #{rnn_sequence_forward.1} parent=5 // pred_region
        %s250 = ssub.s32 %s15, 1
        // Predicated region
        $region45: #{rnn_sequence_forward.1} parent=43 // pred_check
          %p251 = pneg %p83
        $region46: #{rnn_sequence_forward.1} parent=43 // pred_check_branch
          %253 = sbr.rel (%p251) target = $region48
        $region47: #{rnn_sequence_forward.1} parent=43 // pred_region
          %254 = dma.done [#allocation5], 2048
        $region48: #{rnn_sequence_forward.1} parent=43 // pred_fallthru
          _
        %p255 = pneg %p36
        %p256 = pneg %p33
        %p257 = scmp.lt.s32.totalorder %s20, 7
        %s258 = scalar_select %p257, %s20, 7
        %s259 = smul.addr %s258, 4
        %s260 = scalar_lea.vmem %s1, %s259
        %p261 = pneg %p62
        %p262 = pneg %p59
        %p263 = pneg %p83
        %p264 = pneg %p80
        %p265 = pneg %p104
        %p266 = pneg %p101
        %p267 = pneg %p125
        %p268 = pneg %p122
        %p269 = pneg %p146
        %p270 = pneg %p143
        %p271 = pneg %p172
        %p272 = pneg %p169
        %p273 = scmp.lt.s32.totalorder %s20, 7
        %s274 = scalar_select %p273, %s20, 7
        %s275 = smul.addr %s274, 8
        %s276 = scalar_lea.vmem %s6, %s275
        %p277 = pneg %p193
        %p278 = pneg %p190
        %p279 = scmp.lt.s32.totalorder %s20, 7
        %s280 = scalar_select %p279, %s20, 7
        %s281 = smul.addr %s280, 4
        %s282 = scalar_lea.vmem %s1, %s281
        %p283 = scmp.lt.s32.totalorder %s20, 7
        %s284 = scalar_select %p283, %s20, 7
        %s285 = smul.addr %s284, 8
        %s286 = scalar_lea.vmem %s6, %s285
        %p288 = scmp.eq.s32.totalorder %s20, 0
        // Predicated region
        $region49: #{rnn_sequence_forward.1} parent=43 // pred_check
          %p289 = pneg %p288
        $region50: #{rnn_sequence_forward.1} parent=43 // pred_check_branch
          %291 = sbr.rel (%p289) target = $region52
        $region51: #{rnn_sequence_forward.1} parent=43 // pred_region
          %v292 = vld [vmem:[%s0] sm:$0xff]
          %293 = vst [vmem:[#allocation2] sm:$0xff] %v292
        $region52: #{rnn_sequence_forward.1} parent=43 // pred_fallthru
          _
        %v294 = vld [vmem:[%s282] sm:$0xf]
        %295 = vst [vmem:[#allocation3] sm:$0xf] %v294
        %v296 = vld [vmem:[#allocation2] sm:$0xff]
        %v297 = vpack.c.bf16 %v296, %v296
        %298 = vst [vmem:[#allocation3 + $0x4] sm:$0xf] %v297
        %v299 = vld [vmem:[#allocation3] sm:$0xff]
        %v300 = vld [vmem:[#allocation4] sm:$0xf]
        %v301 = vld [vmem:[#allocation4 + $0x4] sm:$0xf]
        %v302 = vld [vmem:[#allocation4 + $0x8] sm:$0xf]
        %v303 = vld [vmem:[#allocation4 + $0xc] sm:$0xf]
        %v304 = vld [vmem:[#allocation4 + $0x10] sm:$0xf]
        %v305 = vld [vmem:[#allocation4 + $0x14] sm:$0xf]
        %v306 = vld [vmem:[#allocation4 + $0x18] sm:$0xf]
        %v307 = vld [vmem:[#allocation4 + $0x1c] sm:$0xf]
        %v308 = vld [vmem:[#allocation4 + $0x20] sm:$0xf]
        %v309 = vld [vmem:[#allocation4 + $0x24] sm:$0xf]
        %v310 = vld [vmem:[#allocation4 + $0x28] sm:$0xf]
        %v311 = vld [vmem:[#allocation4 + $0x2c] sm:$0xf]
        %v312 = vld [vmem:[#allocation4 + $0x30] sm:$0xf]
        %v313 = vld [vmem:[#allocation4 + $0x34] sm:$0xf]
        %v314 = vld [vmem:[#allocation4 + $0x38] sm:$0xf]
        %v315 = vld [vmem:[#allocation4 + $0x3c] sm:$0xf]
        %v316 = vld [vmem:[#allocation4 + $0x40] sm:$0xf]
        %v317 = vld [vmem:[#allocation4 + $0x44] sm:$0xf]
        %v318 = vld [vmem:[#allocation4 + $0x48] sm:$0xf]
        %v319 = vld [vmem:[#allocation4 + $0x4c] sm:$0xf]
        %v320 = vld [vmem:[#allocation4 + $0x50] sm:$0xf]
        %v321 = vld [vmem:[#allocation4 + $0x54] sm:$0xf]
        %v322 = vld [vmem:[#allocation4 + $0x58] sm:$0xf]
        %v323 = vld [vmem:[#allocation4 + $0x5c] sm:$0xf]
        %v324 = vld [vmem:[#allocation4 + $0x60] sm:$0xf]
        %v325 = vld [vmem:[#allocation4 + $0x64] sm:$0xf]
        %v326 = vld [vmem:[#allocation4 + $0x68] sm:$0xf]
        %v327 = vld [vmem:[#allocation4 + $0x6c] sm:$0xf]
        %v328 = vld [vmem:[#allocation4 + $0x70] sm:$0xf]
        %v329 = vld [vmem:[#allocation4 + $0x74] sm:$0xf]
        %v330 = vld [vmem:[#allocation4 + $0x78] sm:$0xf]
        %v331 = vld [vmem:[#allocation4 + $0x7c] sm:$0xf]
        %v332 = vld [vmem:[%s3] sm:$0x1]
        %v334 = vlaneseq
        %v335 = vshrl.u32 %v334, 7
        %v336 = vsub.s32 0, %v335
        %v337 = vrot.slane %v332, %v336
        %v340 = vunpack.c.l.b16 %v299
        %v341 = vunpack.c.h.b16 %v299
        %v342 = vpack.c.b16 %v340, %v340
        %v343 = vpack.c.b16 %v341, %v341
        %v378 = vunpack.c.l.b16 %v300
        %v379 = vunpack.c.l.b16 %v301
        %v380 = vunpack.c.l.b16 %v302
        %v381 = vunpack.c.l.b16 %v303
        %v382 = vunpack.c.l.b16 %v304
        %v383 = vunpack.c.l.b16 %v305
        %v384 = vunpack.c.l.b16 %v306
        %v385 = vunpack.c.l.b16 %v307
        %v386 = vunpack.c.l.b16 %v308
        %v387 = vunpack.c.l.b16 %v309
        %v388 = vunpack.c.l.b16 %v310
        %v389 = vunpack.c.l.b16 %v311
        %v390 = vunpack.c.l.b16 %v312
        %v391 = vunpack.c.l.b16 %v313
        %v392 = vunpack.c.l.b16 %v314
        %v393 = vunpack.c.l.b16 %v315
        %v394 = vunpack.c.l.b16 %v316
        %v395 = vunpack.c.l.b16 %v317
        %v396 = vunpack.c.l.b16 %v318
        %v397 = vunpack.c.l.b16 %v319
        %v398 = vunpack.c.l.b16 %v320
        %v399 = vunpack.c.l.b16 %v321
        %v400 = vunpack.c.l.b16 %v322
        %v401 = vunpack.c.l.b16 %v323
        %v402 = vunpack.c.l.b16 %v324
        %v403 = vunpack.c.l.b16 %v325
        %v404 = vunpack.c.l.b16 %v326
        %v405 = vunpack.c.l.b16 %v327
        %v406 = vunpack.c.l.b16 %v328
        %v407 = vunpack.c.l.b16 %v329
        %v408 = vunpack.c.l.b16 %v330
        %v409 = vunpack.c.l.b16 %v331
        %v410 = vpack.c.b16 %v379, %v378
        %v411 = vpack.c.b16 %v381, %v380
        %v412 = vpack.c.b16 %v383, %v382
        %v413 = vpack.c.b16 %v385, %v384
        %v414 = vpack.c.b16 %v387, %v386
        %v415 = vpack.c.b16 %v389, %v388
        %v416 = vpack.c.b16 %v391, %v390
        %v417 = vpack.c.b16 %v393, %v392
        %v418 = vpack.c.b16 %v395, %v394
        %v419 = vpack.c.b16 %v397, %v396
        %v420 = vpack.c.b16 %v399, %v398
        %v421 = vpack.c.b16 %v401, %v400
        %v422 = vpack.c.b16 %v403, %v402
        %v423 = vpack.c.b16 %v405, %v404
        %v424 = vpack.c.b16 %v407, %v406
        %v425 = vpack.c.b16 %v409, %v408
        %442 = vmatprep.subr.bf16.mxu0 0
        %443 = vmatpush1.bf16.msra.mxu0 %v410
        %444 = vmatprep.subr.bf16.mxu0 0
        %445 = vmatpush1.bf16.msra.mxu0 %v411
        %446 = vmatprep.subr.bf16.mxu0 0
        %447 = vmatpush1.bf16.msra.mxu0 %v412
        %448 = vmatprep.subr.bf16.mxu0 0
        %449 = vmatpush1.bf16.msra.mxu0 %v413
        %450 = vmatprep.subr.bf16.mxu0 0
        %451 = vmatpush1.bf16.msra.mxu0 %v414
        %452 = vmatprep.subr.bf16.mxu0 0
        %453 = vmatpush1.bf16.msra.mxu0 %v415
        %454 = vmatprep.subr.bf16.mxu0 0
        %455 = vmatpush1.bf16.msra.mxu0 %v416
        %456 = vmatprep.subr.bf16.mxu0 0
        %457 = vmatpush1.bf16.msra.mxu0 %v417
        %458 = vmatprep.subr.bf16.mxu0 0
        %459 = vmatpush1.bf16.msra.mxu0 %v418
        %460 = vmatprep.subr.bf16.mxu0 0
        %461 = vmatpush1.bf16.msra.mxu0 %v419
        %462 = vmatprep.subr.bf16.mxu0 0
        %463 = vmatpush1.bf16.msra.mxu0 %v420
        %464 = vmatprep.subr.bf16.mxu0 0
        %465 = vmatpush1.bf16.msra.mxu0 %v421
        %466 = vmatprep.subr.bf16.mxu0 0
        %467 = vmatpush1.bf16.msra.mxu0 %v422
        %468 = vmatprep.subr.bf16.mxu0 0
        %469 = vmatpush1.bf16.msra.mxu0 %v423
        %470 = vmatprep.subr.bf16.mxu0 0
        %471 = vmatpush1.bf16.msra.mxu0 %v424
        %472 = vmatprep.subr.bf16.mxu0 0
        %473 = vmatpush1.bf16.msra.mxu0 %v425
        %474 = vmatprep.mubr.bf16.mxu0 %v343
        %475 = vmatmul.mubr.bf16.gmra.mrb[0].mxu0 %v342
        %v476 = vpop.f32.mrb[0].mxu0
        %v477 = vadd.f32 %v337, %v476
        %v478 = vpop.f32.mrb[0].mxu0
        %v479 = vpop.f32.mrb[0].mxu0
        %v480 = vpop.f32.mrb[0].mxu0
        %481 = vdwg.mxu0
        %v482 = vtanh.pop %v477
        %483 = vst [vmem:[#allocation2] sm:$0xff] %v482
        %v484 = vpack.c.bf16 %v482, %v482
        %v485 = vld [vmem:[%s4] sm:$0xf]
        %v486 = vld [vmem:[%s4 + $0x4] sm:$0xf]
        %v487 = vld [vmem:[%s4 + $0x8] sm:$0xf]
        %v488 = vld [vmem:[%s4 + $0xc] sm:$0xf]
        %v489 = vld [vmem:[%s4 + $0x10] sm:$0xf]
        %v490 = vld [vmem:[%s4 + $0x14] sm:$0xf]
        %v491 = vld [vmem:[%s4 + $0x18] sm:$0xf]
        %v492 = vld [vmem:[%s4 + $0x1c] sm:$0xf]
        %v493 = vld [vmem:[%s4 + $0x20] sm:$0xf]
        %v494 = vld [vmem:[%s4 + $0x24] sm:$0xf]
        %v495 = vld [vmem:[%s4 + $0x28] sm:$0xf]
        %v496 = vld [vmem:[%s4 + $0x2c] sm:$0xf]
        %v497 = vld [vmem:[%s4 + $0x30] sm:$0xf]
        %v498 = vld [vmem:[%s4 + $0x34] sm:$0xf]
        %v499 = vld [vmem:[%s4 + $0x38] sm:$0xf]
        %v500 = vld [vmem:[%s4 + $0x3c] sm:$0xf]
        %v501 = vld [vmem:[%s5] sm:$0x1]
        %v503 = vlaneseq
        %v504 = vshrl.u32 %v503, 7
        %v505 = vsub.s32 0, %v504
        %v506 = vrot.slane %v501, %v505
        %v524 = vunpack.c.l.b16 %v485
        %v525 = vunpack.c.l.b16 %v486
        %v526 = vunpack.c.l.b16 %v487
        %v527 = vunpack.c.l.b16 %v488
        %v528 = vunpack.c.l.b16 %v489
        %v529 = vunpack.c.l.b16 %v490
        %v530 = vunpack.c.l.b16 %v491
        %v531 = vunpack.c.l.b16 %v492
        %v532 = vunpack.c.l.b16 %v493
        %v533 = vunpack.c.l.b16 %v494
        %v534 = vunpack.c.l.b16 %v495
        %v535 = vunpack.c.l.b16 %v496
        %v536 = vunpack.c.l.b16 %v497
        %v537 = vunpack.c.l.b16 %v498
        %v538 = vunpack.c.l.b16 %v499
        %v539 = vunpack.c.l.b16 %v500
        %v540 = vpack.c.b16 %v525, %v524
        %v541 = vpack.c.b16 %v527, %v526
        %v542 = vpack.c.b16 %v529, %v528
        %v543 = vpack.c.b16 %v531, %v530
        %v544 = vpack.c.b16 %v533, %v532
        %v545 = vpack.c.b16 %v535, %v534
        %v546 = vpack.c.b16 %v537, %v536
        %v547 = vpack.c.b16 %v539, %v538
        %556 = vmatprep.subr.bf16.mxu0 0
        %557 = vmatpush1.bf16.msra.mxu0 %v540
        %558 = vmatprep.subr.bf16.mxu0 0
        %559 = vmatpush1.bf16.msra.mxu0 %v541
        %560 = vmatprep.subr.bf16.mxu0 0
        %561 = vmatpush1.bf16.msra.mxu0 %v542
        %562 = vmatprep.subr.bf16.mxu0 0
        %563 = vmatpush1.bf16.msra.mxu0 %v543
        %564 = vmatprep.subr.bf16.mxu0 0
        %565 = vmatpush1.bf16.msra.mxu0 %v544
        %566 = vmatprep.subr.bf16.mxu0 0
        %567 = vmatpush1.bf16.msra.mxu0 %v545
        %568 = vmatprep.subr.bf16.mxu0 0
        %569 = vmatpush1.bf16.msra.mxu0 %v546
        %570 = vmatprep.subr.bf16.mxu0 0
        %571 = vmatpush1.bf16.msra.mxu0 %v547
        %572 = vmatprep.subr.bf16.mxu0 0
        %573 = vmatpush1.bf16.msra.mxu0 0
        %574 = vmatprep.subr.bf16.mxu0 0
        %575 = vmatpush1.bf16.msra.mxu0 0
        %576 = vmatprep.subr.bf16.mxu0 0
        %577 = vmatpush1.bf16.msra.mxu0 0
        %578 = vmatprep.subr.bf16.mxu0 0
        %579 = vmatpush1.bf16.msra.mxu0 0
        %580 = vmatprep.subr.bf16.mxu0 0
        %581 = vmatpush1.bf16.msra.mxu0 0
        %582 = vmatprep.subr.bf16.mxu0 0
        %583 = vmatpush1.bf16.msra.mxu0 0
        %584 = vmatprep.subr.bf16.mxu0 0
        %585 = vmatpush1.bf16.msra.mxu0 0
        %586 = vmatprep.subr.bf16.mxu0 0
        %587 = vmatpush1.bf16.msra.mxu0 0
        %588 = vmatprep.mubr.bf16.mxu0 0
        %589 = vmatmul.mubr.bf16.gmra.mrb[0].mxu0 %v484
        %v590 = vpop.f32.mrb[0].mxu0
        %v591 = vadd.f32 %v506, %v590
        %v592 = vpop.f32.mrb[0].mxu0
        %v593 = vpop.f32.mrb[0].mxu0
        %v594 = vpop.f32.mrb[0].mxu0
        %595 = vdwg.mxu0
        %v596 = vlaneseq
        %v597 = vand.u32 %v596, 127
        %vm598 = vcmp.lt.s32.totalorder %v597, 16
        %v599 = vsel %vm598, %v591, -inf
        %600 = vmax.xlane.f32.xlu0 %v599
        %v601 = vpop.xlane.xlu0 %600
        %v602 = vsub.f32 %v599, %v601
        %v603 = vmul.f32 %v602, 1.442695
        %v604 = vpow.pop %v603
        %605 = vadd.xlane.f32.xlu0 %v604
        %v606 = vpop.xlane.xlu0 %605
        %v607 = vlog2.pop %v606
        %v608 = vmul.f32 %v607, 0.6931472
        %v609 = vsub.f32 %v602, %v608
        %610 = vst [vmem:[%s286] sm:$0xff] %v609
        %p611 = scmp.eq.s32.totalorder %s20, 7
        // Predicated region
        $region53: #{rnn_sequence_forward.1} parent=43 // pred_check
          %p612 = pneg %p611
        $region54: #{rnn_sequence_forward.1} parent=43 // pred_check_branch
          %614 = sbr.rel (%p612) target = $region56
        $region55: #{rnn_sequence_forward.1} parent=43 // pred_region
          %615 = vst [vmem:[%s7] sm:$0xff] %v482
        $region56: #{rnn_sequence_forward.1} parent=43 // pred_fallthru
          _
        %p616 = scmp.lt.s32.totalorder %s20, 7
        %s617 = scalar_select %p616, %s20, 7
        %s618 = smul.addr %s617, 8
        %s619 = scalar_lea.vmem %s6, %s618
        // Predicated region
        $region57: #{rnn_sequence_forward.1} parent=43 // pred_check
          %p620 = pneg %p169
        $region58: #{rnn_sequence_forward.1} parent=43 // pred_check_branch
          %622 = sbr.rel (%p620) target = $region60
        $region59: #{rnn_sequence_forward.1} parent=43 // pred_region
          _
        $region60: #{rnn_sequence_forward.1} parent=43 // pred_fallthru
          _
        // Predicated region
        $region61: #{rnn_sequence_forward.1} parent=43 // pred_check
          %p623 = pneg %p190
        $region62: #{rnn_sequence_forward.1} parent=43 // pred_check_branch
          %625 = sbr.rel (%p623) target = $region64
        $region63: #{rnn_sequence_forward.1} parent=43 // pred_region
          _
        $region64: #{rnn_sequence_forward.1} parent=43 // pred_fallthru
          _
        // Predicated region
        $region65: #{rnn_sequence_forward.1} parent=43 // pred_check
          %p626 = pneg %p190
        $region66: #{rnn_sequence_forward.1} parent=43 // pred_check_branch
          %628 = sbr.rel (%p626) target = $region68
        $region67: #{rnn_sequence_forward.1} parent=43 // pred_region
          _
        $region68: #{rnn_sequence_forward.1} parent=43 // pred_fallthru
          _
      $region44: #{rnn_sequence_forward.1} parent=5 // pred_fallthru
        _
      %p629 = scmp.le.s32.totalorder 2, %s15
      // Predicated region
      $region69: #{rnn_sequence_forward.1} parent=5 // pred_check
        %p630 = pneg %p629
      $region70: #{rnn_sequence_forward.1} parent=5 // pred_check_branch
        %632 = sbr.rel (%p630) target = $region72
      $region71: #{rnn_sequence_forward.1} parent=5 // pred_region
        %s633 = ssub.s32 %s15, 2
        // Predicated region
        $region73: #{rnn_sequence_forward.1} parent=71 // pred_check
          %p634 = pneg %p175
        $region74: #{rnn_sequence_forward.1} parent=71 // pred_check_branch
          %636 = sbr.rel (%p634) target = $region76
        $region75: #{rnn_sequence_forward.1} parent=71 // pred_region
          %p637 = scmp.lt.s32.totalorder %s21, 7
          %s638 = scalar_select %p637, %s21, 7
          %s639 = smul.addr %s638, 8
          %s640 = scalar_lea.vmem %s6, %s639
        $region76: #{rnn_sequence_forward.1} parent=71 // pred_fallthru
          _
      $region72: #{rnn_sequence_forward.1} parent=5 // pred_fallthru
        _
    $region6: #{rnn_sequence_forward.1} parent=1 // loop_footer
      %s19 = sadd.s32 1, %s15
    $region7: #{rnn_sequence_forward.1} parent=1 // loop_footer_branch
      %14 = sbr.rel target = $region3
    $region8: #{rnn_sequence_forward.1} parent=1 // loop_exit
      _
    %641 = vsyncpa [#allocation5], 1
    %s642 = scalar_lea.sflag [#allocation5], 1
    %643 = vsyncpa %s642, 1

</llo_original>
